<compile_context>
chip_gen: v7x
topology: tpu7x:2x2x1
jax: 0.10.0
libtpu: 0.0.40
codegen_flags: <defaults>
</compile_context>

<pallas_src>
import functools

import jax
import jax.numpy as jnp
from jax.experimental import pallas as pl
from jax.experimental.pallas import tpu as pltpu


def _round_up(x, m):
    return ((x + m - 1) // m) * m


def _basic_conv1d_kernel(x_ref, xh_ref, w_ref, a_ref, c_ref, o_ref, im_ref,
                         *, K, Cin, TL, silu):
    # ---- im2col: build the (K*Cin, TL) slab for this output tile by writing
    #      static ref slices into VMEM scratch (no concatenates). ----------
    for k in range(K):                                   # K static -> unrolled
        im_ref[k * Cin:(k + 1) * Cin, 0:TL - k] = x_ref[0, :, k:TL]
        if k > 0:                                        # halo from next tile
            im_ref[k * Cin:(k + 1) * Cin, TL - k:TL] = xh_ref[0, :, 0:k]

    # ---- conv over all taps as a single MXU matmul (f32 accumulation) ----
    z = jnp.dot(w_ref[...], im_ref[...], preferred_element_type=jnp.float32)

    # ---- conv bias + BatchNorm folded into per-channel scale/shift --------
    z = z * a_ref[...] + c_ref[...]

    # ---- SiLU --------------------------------------------------------------
    if silu:
        z = z * jax.nn.sigmoid(z)

    o_ref[0] = z.astype(o_ref.dtype)


def basic_conv1d(x, params, *, kernel_size, stride=1, padding=0, silu=True,
                 eps=1e-5, lout_tile=512, compute_dtype=jnp.float32):
    """Pallas forward of BasicConv.  x: (B, Cin, L) float32, NCL layout.

    params = (W, b, gamma, beta, running_mean, running_var), W in torch
    Conv1d layout (Cout, Cin, K).  BatchNorm is applied in inference mode
    (running statistics) folded into a per-channel scale/shift.
    """
    # TODO(synk): stride > 1 would need strided im2col gathers; module default is 1.
    assert stride == 1, "kernel implements stride=1 (BasicConv default)"
    W, b, gamma, beta, mean, var = params
    B, Cin, L = x.shape
    Cout, Cin_w, K = W.shape
    assert K == kernel_size and Cin_w == Cin
    Lout = L + 2 * padding - K + 1
    assert Lout > 0

    TLH = 128                                   # halo view width (>= K-1)
    assert K - 1 <= TLH, "kernel_size too large for 128-wide halo view"
    TL = max(128, min(_round_up(lout_tile, 128), _round_up(Lout, 128)))
    Nt = pl.cdiv(Lout, TL)
    Lxp = Nt * TL + TLH                         # padded input length

    right_pad = Lxp - L - padding
    assert right_pad >= 0
    # TODO(synk): for very long L, apply the conv edge padding in-kernel
    # (masked taps) instead of materializing a padded copy of x in HBM.
    xp = jnp.pad(x, ((0, 0), (0, 0), (padding, right_pad))).astype(compute_dtype)

    # Weight as (Cout, K*Cin) with columns ordered k-major (matches im2col rows).
    w2d = jnp.transpose(W, (0, 2, 1)).reshape(Cout, K * Cin).astype(compute_dtype)

    # Fold conv bias + BN(running stats) into per-channel scale a, shift c.
    a = (gamma * jax.lax.rsqrt(var + eps)).astype(jnp.float32)
    c = (beta + (b - mean) * a).astype(jnp.float32)
    a2 = a.reshape(Cout, 1)
    c2 = c.reshape(Cout, 1)

    itm = jnp.dtype(compute_dtype).itemsize
    vmem_est = (2 * Cin * (TL + TLH) * itm      # double-buffered x main + halo
                + 2 * Cout * K * Cin * itm      # weights
                + 4 * Cout * 4                  # scale / shift
                + 2 * Cout * TL * 4             # double-buffered output tile
                + K * Cin * TL * itm)           # im2col scratch
    vmem_limit = int(min(64 * 2 ** 20, max(32 * 2 ** 20, 4 * vmem_est)))

    kernel = functools.partial(_basic_conv1d_kernel, K=K, Cin=Cin, TL=TL, silu=silu)

    out = pl.pallas_call(
        kernel,
        out_shape=jax.ShapeDtypeStruct((B, Cout, Nt * TL), jnp.float32),
        grid=(B, Nt),
        in_specs=[
            # main input tile for this output tile
            pl.BlockSpec((1, Cin, TL), lambda bb, t: (bb, 0, t)),
            # 128-wide halo view: first K-1 columns of the *next* tile
            pl.BlockSpec((1, Cin, TLH), lambda bb, t: (bb, 0, (t + 1) * (TL // TLH))),
            # resident operands (block index constant -> fetched once)
            pl.BlockSpec((Cout, K * Cin), lambda bb, t: (0, 0)),
            pl.BlockSpec((Cout, 1), lambda bb, t: (0, 0)),
            pl.BlockSpec((Cout, 1), lambda bb, t: (0, 0)),
        ],
        out_specs=pl.BlockSpec((1, Cout, TL), lambda bb, t: (bb, 0, t)),
        scratch_shapes=[pltpu.VMEM((K * Cin, TL), compute_dtype)],
        compiler_params=pltpu.CompilerParams(
            dimension_semantics=("parallel", "parallel"),
            vmem_limit_bytes=vmem_limit),
        cost_estimate=pl.CostEstimate(
            flops=2 * B * Cout * K * Cin * Lout,
            transcendentals=(B * Cout * Lout) if silu else 0,
            bytes_accessed=(B * Cin * Lxp * itm            # x (main views)
                            + B * Cin * TLH * Nt * itm     # x (halo re-reads)
                            + Cout * K * Cin * itm         # weights
                            + B * Cout * Lout * 4)),       # output
    )(xp, xp, w2d, a2, c2)

    if Nt * TL != Lout:
        out = out[:, :, :Lout]
    return out


def init_params(key, in_planes, out_planes, kernel_size):
    """Deterministic synthetic parameters matching BasicConv's submodules."""
    ks = jax.random.split(key, 6)
    W = jax.random.normal(ks[0], (out_planes, in_planes, kernel_size), jnp.float32) * 0.1
    b = jax.random.normal(ks[1], (out_planes,), jnp.float32) * 0.1
    gamma = 1.0 + 0.1 * jax.random.normal(ks[2], (out_planes,), jnp.float32)
    beta = 0.1 * jax.random.normal(ks[3], (out_planes,), jnp.float32)
    mean = 0.1 * jax.random.normal(ks[4], (out_planes,), jnp.float32)
    var = jax.random.uniform(ks[5], (out_planes,), jnp.float32, 0.5, 1.5)
    return (W, b, gamma, beta, mean, var)


def basic_conv_ref(x, params, *, kernel_size, stride=1, padding=0, silu=True, eps=1e-5):
    """Pure-JAX reference reproducing the PyTorch forward (eval-mode BN)."""
    W, b, gamma, beta, mean, var = params
    y = jax.lax.conv_general_dilated(
        x, W, window_strides=(stride,), padding=[(padding, padding)],
        dimension_numbers=('NCH', 'OIH', 'NCH'))
    y = y + b[None, :, None]
    y = (y - mean[None, :, None]) / jnp.sqrt(var[None, :, None] + eps)
    y = y * gamma[None, :, None] + beta[None, :, None]
    if silu:
        y = y * jax.nn.sigmoid(y)
    return y


if __name__ == "__main__":
    key = jax.random.PRNGKey(0)

    def check(name, *, B, Cin, Cout, K, L, pad, silu, lout_tile, cdt, atol, rtol, key):
        kx, kp = jax.random.split(key)
        x = jax.random.normal(kx, (B, Cin, L), jnp.float32)
        params = init_params(kp, Cin, Cout, K)
        out = basic_conv1d(x, params, kernel_size=K, stride=1, padding=pad,
                           silu=silu, lout_tile=lout_tile, compute_dtype=cdt)
        out = jax.block_until_ready(out)
        ref = basic_conv_ref(x, params, kernel_size=K, stride=1, padding=pad, silu=silu)
        if not bool(jnp.allclose(out, ref, atol=atol, rtol=rtol)):
            err = float(jnp.max(jnp.abs(out - ref)))
            raise AssertionError(f"{name}: Pallas BasicConv mismatch, max|diff|={err:.3e}")

    k1, k2, k3 = jax.random.split(key, 3)
    # f32, tiled along L (2 tiles), halo crossing exercised.
    check("f32/k3", B=2, Cin=16, Cout=32, K=3, L=256, pad=1, silu=True,
          lout_tile=128, cdt=jnp.float32, atol=1e-3, rtol=1e-3, key=k1)
    # f32, no padding, no SiLU, Lout not a multiple of the tile (tail handling).
    check("f32/k5", B=2, Cin=8, Cout=20, K=5, L=200, pad=0, silu=False,
          lout_tile=256, cdt=jnp.float32, atol=1e-3, rtol=1e-3, key=k2)
    # bf16 MXU operands (v6e/v7x fast path), looser tolerance.
    check("bf16/k3", B=2, Cin=16, Cout=32, K=3, L=256, pad=1, silu=True,
          lout_tile=128, cdt=jnp.bfloat16, atol=1e-1, rtol=1e-1, key=k3)

    print("KERNEL_OK")
</pallas_src>

<mosaic_0001>
module attributes {stable_mosaic.version = 11 : i64} {
  func.func @_basic_conv1d_kernel(%arg0: i32, %arg1: i32, %arg2: memref<1x16x128xf32, #tpu.memory_space<vmem>>, %arg3: memref<1x16x128xf32, #tpu.memory_space<vmem>>, %arg4: memref<32x48xf32, #tpu.memory_space<vmem>>, %arg5: memref<32x1xf32, #tpu.memory_space<vmem>>, %arg6: memref<32x1xf32, #tpu.memory_space<vmem>>, %arg7: memref<1x32x128xf32, #tpu.memory_space<vmem>>, %arg8: memref<48x128xf32, #tpu.memory_space<vmem>>) attributes {dimension_semantics = [#tpu.dimension_semantics<parallel>, #tpu.dimension_semantics<parallel>], iteration_bounds = array<i64: 2, 2>, scalar_prefetch = 0 : i64, scratch_operands = 1 : i64, tpu.core_type = #tpu.core_type<tc>, window_params = [{transform_indices = @transform_0, window_bounds = array<i64: 1, 16, 128>}, {transform_indices = @transform_1, window_bounds = array<i64: 1, 16, 128>}, {pipeline_mode = #tpu.pipeline_mode<synchronous>, transform_indices = @transform_2, window_bounds = array<i64: 32, 48>}, {pipeline_mode = #tpu.pipeline_mode<synchronous>, transform_indices = @transform_3, window_bounds = array<i64: 32, 1>}, {pipeline_mode = #tpu.pipeline_mode<synchronous>, transform_indices = @transform_4, window_bounds = array<i64: 32, 1>}, {transform_indices = @transform_5, window_bounds = array<i64: 1, 32, 128>}]} {
    %c0 = arith.constant 0 : index
    %c0_0 = arith.constant 0 : index
    %c0_1 = arith.constant 0 : index
    %0 = vector.load %arg2[%c0, %c0_0, %c0_1] : memref<1x16x128xf32, #tpu.memory_space<vmem>>, vector<1x16x128xf32>
    %1 = vector.shape_cast %0 : vector<1x16x128xf32> to vector<16x128xf32>
    %c0_2 = arith.constant 0 : index
    %c0_3 = arith.constant 0 : index
    %2 = vector.load %arg8[%c0_2, %c0_3] : memref<48x128xf32, #tpu.memory_space<vmem>>, vector<16x128xf32>
    tpu.vector_store %arg8[%c0_2, %c0_3], %1 {strides = array<i32>} : memref<48x128xf32, #tpu.memory_space<vmem>>, vector<16x128xf32>,
    %c0_4 = arith.constant 0 : index
    %c0_5 = arith.constant 0 : index
    %c1 = arith.constant 1 : index
    %3 = vector.load %arg2[%c0_4, %c0_5, %c1] : memref<1x16x128xf32, #tpu.memory_space<vmem>>, vector<1x16x127xf32>
    %4 = vector.shape_cast %3 : vector<1x16x127xf32> to vector<16x127xf32>
    %c16 = arith.constant 16 : index
    %c0_6 = arith.constant 0 : index
    %5 = vector.load %arg8[%c16, %c0_6] : memref<48x128xf32, #tpu.memory_space<vmem>>, vector<16x127xf32>
    tpu.vector_store %arg8[%c16, %c0_6], %4 {strides = array<i32>} : memref<48x128xf32, #tpu.memory_space<vmem>>, vector<16x127xf32>,
    %c0_7 = arith.constant 0 : index
    %c0_8 = arith.constant 0 : index
    %c0_9 = arith.constant 0 : index
    %6 = vector.load %arg3[%c0_7, %c0_8, %c0_9] : memref<1x16x128xf32, #tpu.memory_space<vmem>>, vector<1x16x1xf32>
    %7 = vector.shape_cast %6 : vector<1x16x1xf32> to vector<16x1xf32>
    %c16_10 = arith.constant 16 : index
    %c127 = arith.constant 127 : index
    %8 = vector.load %arg8[%c16_10, %c127] : memref<48x128xf32, #tpu.memory_space<vmem>>, vector<16x1xf32>
    tpu.vector_store %arg8[%c16_10, %c127], %7 {strides = array<i32>} : memref<48x128xf32, #tpu.memory_space<vmem>>, vector<16x1xf32>,
    %c0_11 = arith.constant 0 : index
    %c0_12 = arith.constant 0 : index
    %c2 = arith.constant 2 : index
    %9 = vector.load %arg2[%c0_11, %c0_12, %c2] : memref<1x16x128xf32, #tpu.memory_space<vmem>>, vector<1x16x126xf32>
    %10 = vector.shape_cast %9 : vector<1x16x126xf32> to vector<16x126xf32>
    %c32 = arith.constant 32 : index
    %c0_13 = arith.constant 0 : index
    %11 = vector.load %arg8[%c32, %c0_13] : memref<48x128xf32, #tpu.memory_space<vmem>>, vector<16x126xf32>
    tpu.vector_store %arg8[%c32, %c0_13], %10 {strides = array<i32>} : memref<48x128xf32, #tpu.memory_space<vmem>>, vector<16x126xf32>,
    %c0_14 = arith.constant 0 : index
    %c0_15 = arith.constant 0 : index
    %c0_16 = arith.constant 0 : index
    %12 = vector.load %arg3[%c0_14, %c0_15, %c0_16] : memref<1x16x128xf32, #tpu.memory_space<vmem>>, vector<1x16x2xf32>
    %13 = vector.shape_cast %12 : vector<1x16x2xf32> to vector<16x2xf32>
    %c32_17 = arith.constant 32 : index
    %c126 = arith.constant 126 : index
    %14 = vector.load %arg8[%c32_17, %c126] : memref<48x128xf32, #tpu.memory_space<vmem>>, vector<16x2xf32>
    tpu.vector_store %arg8[%c32_17, %c126], %13 {strides = array<i32>} : memref<48x128xf32, #tpu.memory_space<vmem>>, vector<16x2xf32>,
    %c0_18 = arith.constant 0 : index
    %c0_19 = arith.constant 0 : index
    %15 = vector.load %arg4[%c0_18, %c0_19] : memref<32x48xf32, #tpu.memory_space<vmem>>, vector<32x48xf32>
    %c0_20 = arith.constant 0 : index
    %c0_21 = arith.constant 0 : index
    %16 = vector.load %arg8[%c0_20, %c0_21] : memref<48x128xf32, #tpu.memory_space<vmem>>, vector<48x128xf32>
    %cst = arith.constant dense<0.000000e+00> : vector<32x128xf32>
    %17 = tpu.matmul %15, %16, %cst {dimension_numbers = #tpu.dot_dimension_numbers<[1], [0], [0], [1], [0, 0, 1, 1], [], []>} : vector<32x48xf32>, vector<48x128xf32>, vector<32x128xf32> -> vector<32x128xf32>
    %c0_22 = arith.constant 0 : index
    %c0_23 = arith.constant 0 : index
    %18 = vector.load %arg5[%c0_22, %c0_23] : memref<32x1xf32, #tpu.memory_space<vmem>>, vector<32x1xf32>
    %19 = vector.broadcast %18 : vector<32x1xf32> to vector<32x128xf32>
    %20 = arith.mulf %17, %19 : vector<32x128xf32>
    %c0_24 = arith.constant 0 : index
    %c0_25 = arith.constant 0 : index
    %21 = vector.load %arg6[%c0_24, %c0_25] : memref<32x1xf32, #tpu.memory_space<vmem>>, vector<32x1xf32>
    %22 = vector.broadcast %21 : vector<32x1xf32> to vector<32x128xf32>
    %23 = arith.addf %20, %22 : vector<32x128xf32>
    %24 = arith.negf %23 : vector<32x128xf32>
    %25 = math.exp %24 : vector<32x128xf32>
    %cst_26 = arith.constant 1.000000e+00 : f32
    %26 = vector.broadcast %cst_26 : f32 to vector<32x128xf32>
    %27 = arith.addf %26, %25 : vector<32x128xf32>
    %28 = arith.divf %26, %27 : vector<32x128xf32>
    %29 = arith.mulf %23, %28 : vector<32x128xf32>
    %c0_27 = arith.constant 0 : index
    %c0_28 = arith.constant 0 : index
    %c0_29 = arith.constant 0 : index
    %30 = vector.load %arg7[%c0_27, %c0_28, %c0_29] : memref<1x32x128xf32, #tpu.memory_space<vmem>>, vector<1x32x128xf32>
    %31 = vector.shape_cast %30 : vector<1x32x128xf32> to vector<32x128xf32>
    %32 = vector.shape_cast %29 : vector<32x128xf32> to vector<1x32x128xf32>
    tpu.vector_store %arg7[%c0_27, %c0_28, %c0_29], %32 {strides = array<i32>} : memref<1x32x128xf32, #tpu.memory_space<vmem>>, vector<1x32x128xf32>,
    return
  }
  func.func @transform_0(%arg0: i32, %arg1: i32) -> (i32, i32, i32) {
    %c0_i32 = arith.constant 0 : i32
    %c0_i32_0 = arith.constant 0 : i32
    return %arg0, %c0_i32, %arg1 : i32, i32, i32
  }
  func.func @transform_1(%arg0: i32, %arg1: i32) -> (i32, i32, i32) {
    %c1_i32 = arith.constant 1 : i32
    %0 = arith.addi %arg1, %c1_i32 : i32
    %c1_i32_0 = arith.constant 1 : i32
    %1 = arith.muli %0, %c1_i32_0 : i32
    %c0_i32 = arith.constant 0 : i32
    %c0_i32_1 = arith.constant 0 : i32
    return %arg0, %c0_i32, %1 : i32, i32, i32
  }
  func.func @transform_2(%arg0: i32, %arg1: i32) -> (i32, i32) {
    %c0_i32 = arith.constant 0 : i32
    %c0_i32_0 = arith.constant 0 : i32
    %c0_i32_1 = arith.constant 0 : i32
    return %c0_i32, %c0_i32_0 : i32, i32
  }
  func.func @transform_3(%arg0: i32, %arg1: i32) -> (i32, i32) {
    %c0_i32 = arith.constant 0 : i32
    %c0_i32_0 = arith.constant 0 : i32
    %c0_i32_1 = arith.constant 0 : i32
    return %c0_i32, %c0_i32_0 : i32, i32
  }
  func.func @transform_4(%arg0: i32, %arg1: i32) -> (i32, i32) {
    %c0_i32 = arith.constant 0 : i32
    %c0_i32_0 = arith.constant 0 : i32
    %c0_i32_1 = arith.constant 0 : i32
    return %c0_i32, %c0_i32_0 : i32, i32
  }
  func.func @transform_5(%arg0: i32, %arg1: i32) -> (i32, i32, i32) {
    %c0_i32 = arith.constant 0 : i32
    %c0_i32_0 = arith.constant 0 : i32
    return %arg0, %c0_i32, %arg1 : i32, i32, i32
  }
}

</mosaic_0001>

<llo_original>
// kernel: tpu_custom_call.1
$region0: #{tpu_custom_call.1}
  #allocation0 [shape = 'u32[]', space=smem, size = 0x4, offset = 0x4, fixed_abs, tag = 'smem constant byte address 0x4 - core index']
  #allocation1 [shape = 'u32[144,128]{1,0:T(1,128)}', space=vmem, size = 0x12000, scoped, tag = 'internal scratch']
  #allocation2 [shape = 'f32[48,128]{1,0:T(8,128)}', space=vmem, size = 0x6000, scoped, tag = 'scratch operand']
  %s0 = inlined_call_operand.hbm [shape: f32[2,16,384], index: 0, kind: input, shape index: {}]
  %s1 = inlined_call_operand.hbm [shape: f32[2,16,384], index: 1, kind: input, shape index: {}]
  %s2 = inlined_call_operand.vmem [shape: f32[32,48], index: 2, kind: input, shape index: {}]
  %s3 = inlined_call_operand.vmem [shape: f32[32,1], index: 3, kind: input, shape index: {}]
  %s4 = inlined_call_operand.vmem [shape: f32[32,1], index: 4, kind: input, shape index: {}]
  %s5 = inlined_call_operand.hbm [shape: f32[2,32,256], index: 5, kind: output, shape index: {}]
  %s6 = sld [smem:[#allocation0]]
  $region61: #{tpu_custom_call.1} parent=0
    _
  %s8 = ssub.s32 1, %s6
  %s9 = scalar_select 0, %s8, %s6
  $region1: #{tpu_custom_call.1} parent=0
    #allocation3 [shape = 'u8[16384]{0}', space=vmem, size = 0x4000, scoped, tag = 'input window, operand 0']
    #allocation4 [shape = 's32[2]{0}', space=sflag, size = 0x8, scoped, tag = 'scoped memory for tpu_custom_call.1']
    #allocation5 [shape = 's32[2]{0}', space=sflag, size = 0x8, scoped, tag = 'scoped memory for tpu_custom_call.1']
    #allocation6 [shape = 'u8[16384]{0}', space=vmem, size = 0x4000, scoped, tag = 'input window, operand 1']
    #allocation7 [shape = 's32[2]{0}', space=sflag, size = 0x8, scoped, tag = 'scoped memory for tpu_custom_call.1']
    #allocation8 [shape = 'u8[32768]{0}', space=vmem, size = 0x8000, scoped, tag = 'output window, operand 0']
    %10 = vsyncpa [#allocation4], 0
    %s11 = scalar_lea.sflag [#allocation4], 1
    %12 = vsyncpa %s11, 0
    %13 = vsyncpa [#allocation7], 0
    %s14 = scalar_lea.sflag [#allocation7], 1
    %15 = vsyncpa %s14, 0
    %16 = vsyncpa [#allocation5], 0
    %s17 = scalar_lea.sflag [#allocation5], 1
    %18 = vsyncpa %s17, 0
    loop: start=0, step=1, limit=6
    $region2: #{tpu_custom_call.1} parent=1 // loop_pre_header
      _
    $region3: #{tpu_custom_call.1} parent=1 // loop_header
      %s20 = sphi 0, %s24
      %p21 = scmp.ge.s32.totalorder %s20, 6
      %s27 = sphi 0, %s39
      %s28 = sphi 0, %s35
      %s29 = sphi 0, %s27
      %s30 = sphi 0, %s28
      %s31 = sphi 0, %s29
      %s32 = sphi 0, %s30
      %s44 = sphi 0, %s46
      %s47 = sphi 0, %s44
      %s48 = sphi 0, %s47
      %s64 = sphi 0, %s48
      %s74 = sphi 0, %s76
      %s77 = sphi 0, %s74
      %s78 = sphi 0, %s77
      %s94 = sphi 0, %s78
      %s98 = sphi 0, %s98
      %s100 = sphi 0, %s98
      %s101 = sphi 0, %s100
      %s115 = sphi 0, %s101
      %s119 = sphi 0, %s119
      %s121 = sphi 0, %s119
      %s122 = sphi 0, %s121
      %s136 = sphi 0, %s122
      %s140 = sphi 0, %s140
      %s142 = sphi 0, %s140
      %s143 = sphi 0, %s142
      %s157 = sphi 0, %s143
      %s165 = sphi 0, %s167
      %s168 = sphi 0, %s165
      %s169 = sphi 0, %s168
      %s185 = sphi 0, %s169
    $region4: #{tpu_custom_call.1} parent=1 // loop_header_branch
      %23 = sbr.rel (%p21) target = $region8
    $region5: #{tpu_custom_call.1} parent=1 // loop_body
      %s25 = ssub.s32 %s20, 1
      %s26 = ssub.s32 %s20, 2
      %s33 = sadd.s32 1, %s28
      %p34 = scmp.ge.s32.totalorder %s33, 2
      %s35 = scalar_select %p34, 0, %s33
      %s36 = sadd.s32 1, %s27
      %s37 = scalar_select %p34, %s36, %s27
      %p38 = scmp.ge.s32.totalorder %s37, 2
      %s39 = scalar_select %p38, 0, %s37
      %s40 = ssub.s32 %s27, %s39
      %s41 = ssub.s32 %s28, %s35
      %s42 = sor.u32 %s40, %s41
      %p43 = scmp.eq.s32.totalorder %s42, 0
      %s45 = sadd.s32 %s44, 1
      %s46 = scalar_select %p43, %s44, %s45
      %p49 = pneg %p43
      %p50 = scmp.eq.s32.totalorder %s20, 3
      %p51 = por %p49, %p50
      %p52 = scmp.ne.s32.totalorder %s44, %s47
      %p53 = scmp.eq.s32.totalorder %s20, 0
      %p54 = por %p52, %p53
      %p55 = scmp.ne.s32.totalorder %s44, %s47
      %p56 = scmp.eq.s32.totalorder %s25, 3
      %p57 = por %p55, %p56
      %p58 = scmp.ne.s32.totalorder %s47, %s48
      %p59 = scmp.eq.s32.totalorder %s25, 0
      %p60 = por %p58, %p59
      %p61 = scmp.ne.s32.totalorder %s47, %s48
      %p62 = scmp.eq.s32.totalorder %s26, 3
      %p63 = por %p61, %p62
      %p65 = scmp.ne.s32.totalorder %s48, %s64
      %p66 = scmp.eq.s32.totalorder %s26, 0
      %p67 = por %p65, %p66
      %s68 = sadd.s32 %s28, 1
      %s69 = sadd.s32 %s35, 1
      %s70 = ssub.s32 %s27, %s39
      %s71 = ssub.s32 %s68, %s69
      %s72 = sor.u32 %s70, %s71
      %p73 = scmp.eq.s32.totalorder %s72, 0
      %s75 = sadd.s32 %s74, 1
      %s76 = scalar_select %p73, %s74, %s75
      %p79 = pneg %p73
      %p80 = scmp.eq.s32.totalorder %s20, 3
      %p81 = por %p79, %p80
      %p82 = scmp.ne.s32.totalorder %s74, %s77
      %p83 = scmp.eq.s32.totalorder %s20, 0
      %p84 = por %p82, %p83
      %p85 = scmp.ne.s32.totalorder %s74, %s77
      %p86 = scmp.eq.s32.totalorder %s25, 3
      %p87 = por %p85, %p86
      %p88 = scmp.ne.s32.totalorder %s77, %s78
      %p89 = scmp.eq.s32.totalorder %s25, 0
      %p90 = por %p88, %p89
      %p91 = scmp.ne.s32.totalorder %s77, %s78
      %p92 = scmp.eq.s32.totalorder %s26, 3
      %p93 = por %p91, %p92
      %p95 = scmp.ne.s32.totalorder %s78, %s94
      %p96 = scmp.eq.s32.totalorder %s26, 0
      %p97 = por %p95, %p96
      %s99 = sadd.s32 %s98, 1
      %p102 = scmp.eq.s32.totalorder %s20, 3
      %p103 = scmp.ne.s32.totalorder %s98, %s100
      %p104 = scmp.eq.s32.totalorder %s20, 0
      %p105 = por %p103, %p104
      %p106 = scmp.ne.s32.totalorder %s98, %s100
      %p107 = scmp.eq.s32.totalorder %s25, 3
      %p108 = por %p106, %p107
      %p109 = scmp.ne.s32.totalorder %s100, %s101
      %p110 = scmp.eq.s32.totalorder %s25, 0
      %p111 = por %p109, %p110
      %p112 = scmp.ne.s32.totalorder %s100, %s101
      %p113 = scmp.eq.s32.totalorder %s26, 3
      %p114 = por %p112, %p113
      %p116 = scmp.ne.s32.totalorder %s101, %s115
      %p117 = scmp.eq.s32.totalorder %s26, 0
      %p118 = por %p116, %p117
      %s120 = sadd.s32 %s119, 1
      %p123 = scmp.eq.s32.totalorder %s20, 3
      %p124 = scmp.ne.s32.totalorder %s119, %s121
      %p125 = scmp.eq.s32.totalorder %s20, 0
      %p126 = por %p124, %p125
      %p127 = scmp.ne.s32.totalorder %s119, %s121
      %p128 = scmp.eq.s32.totalorder %s25, 3
      %p129 = por %p127, %p128
      %p130 = scmp.ne.s32.totalorder %s121, %s122
      %p131 = scmp.eq.s32.totalorder %s25, 0
      %p132 = por %p130, %p131
      %p133 = scmp.ne.s32.totalorder %s121, %s122
      %p134 = scmp.eq.s32.totalorder %s26, 3
      %p135 = por %p133, %p134
      %p137 = scmp.ne.s32.totalorder %s122, %s136
      %p138 = scmp.eq.s32.totalorder %s26, 0
      %p139 = por %p137, %p138
      %s141 = sadd.s32 %s140, 1
      %p144 = scmp.eq.s32.totalorder %s20, 3
      %p145 = scmp.ne.s32.totalorder %s140, %s142
      %p146 = scmp.eq.s32.totalorder %s20, 0
      %p147 = por %p145, %p146
      %p148 = scmp.ne.s32.totalorder %s140, %s142
      %p149 = scmp.eq.s32.totalorder %s25, 3
      %p150 = por %p148, %p149
      %p151 = scmp.ne.s32.totalorder %s142, %s143
      %p152 = scmp.eq.s32.totalorder %s25, 0
      %p153 = por %p151, %p152
      %p154 = scmp.ne.s32.totalorder %s142, %s143
      %p155 = scmp.eq.s32.totalorder %s26, 3
      %p156 = por %p154, %p155
      %p158 = scmp.ne.s32.totalorder %s143, %s157
      %p159 = scmp.eq.s32.totalorder %s26, 0
      %p160 = por %p158, %p159
      %s161 = ssub.s32 %s27, %s39
      %s162 = ssub.s32 %s28, %s35
      %s163 = sor.u32 %s161, %s162
      %p164 = scmp.eq.s32.totalorder %s163, 0
      %s166 = sadd.s32 %s165, 1
      %s167 = scalar_select %p164, %s165, %s166
      %p170 = pneg %p164
      %p171 = scmp.eq.s32.totalorder %s20, 3
      %p172 = por %p170, %p171
      %p173 = scmp.ne.s32.totalorder %s165, %s168
      %p174 = scmp.eq.s32.totalorder %s20, 0
      %p175 = por %p173, %p174
      %p176 = scmp.ne.s32.totalorder %s165, %s168
      %p177 = scmp.eq.s32.totalorder %s25, 3
      %p178 = por %p176, %p177
      %p179 = scmp.ne.s32.totalorder %s168, %s169
      %p180 = scmp.eq.s32.totalorder %s25, 0
      %p181 = por %p179, %p180
      %p182 = scmp.ne.s32.totalorder %s168, %s169
      %p183 = scmp.eq.s32.totalorder %s26, 3
      %p184 = por %p182, %p183
      %p186 = scmp.ne.s32.totalorder %s169, %s185
      %p187 = scmp.eq.s32.totalorder %s26, 0
      %p188 = por %p186, %p187
      %p189 = scmp.le.s32.totalorder 1, %s20
      %p190 = scmp.lt.s32.totalorder %s20, 5
      %p191 = pnand %p189, %p190
      %p192 = pneg %p191
      // Predicated region
      $region9: #{tpu_custom_call.1} parent=5 // pred_check
        _
      $region10: #{tpu_custom_call.1} parent=5 // pred_check_branch
        %194 = sbr.rel (%p191) target = $region12
      $region11: #{tpu_custom_call.1} parent=5 // pred_region
        %s195 = ssub.s32 %s20, 1
        // Predicated region
        $region13: #{tpu_custom_call.1} parent=11 // pred_check
          %p196 = pneg %p111
        $region14: #{tpu_custom_call.1} parent=11 // pred_check_branch
          %198 = sbr.rel (%p196) target = $region16
        $region15: #{tpu_custom_call.1} parent=11 // pred_region
          _
        $region16: #{tpu_custom_call.1} parent=11 // pred_fallthru
          _
        // Predicated region
        $region17: #{tpu_custom_call.1} parent=11 // pred_check
          %p199 = pneg %p132
        $region18: #{tpu_custom_call.1} parent=11 // pred_check_branch
          %201 = sbr.rel (%p199) target = $region20
        $region19: #{tpu_custom_call.1} parent=11 // pred_region
          _
        $region20: #{tpu_custom_call.1} parent=11 // pred_fallthru
          _
        // Predicated region
        $region21: #{tpu_custom_call.1} parent=11 // pred_check
          %p202 = pneg %p153
        $region22: #{tpu_custom_call.1} parent=11 // pred_check_branch
          %204 = sbr.rel (%p202) target = $region24
        $region23: #{tpu_custom_call.1} parent=11 // pred_region
          _
        $region24: #{tpu_custom_call.1} parent=11 // pred_fallthru
          _
      $region12: #{tpu_custom_call.1} parent=5 // pred_fallthru
        _
      %p205 = scmp.lt.s32.totalorder %s20, 4
      // Predicated region
      $region25: #{tpu_custom_call.1} parent=5 // pred_check
        %p206 = pneg %p205
      $region26: #{tpu_custom_call.1} parent=5 // pred_check_branch
        %208 = sbr.rel (%p206) target = $region28
      $region27: #{tpu_custom_call.1} parent=5 // pred_region
        // Predicated region
        $region29: #{tpu_custom_call.1} parent=27 // pred_check
          %p209 = pneg %p54
        $region30: #{tpu_custom_call.1} parent=27 // pred_check_branch
          %211 = sbr.rel (%p209) target = $region32
        $region31: #{tpu_custom_call.1} parent=27 // pred_region
          %s212 = sand.u32 %s44, 1
          %s213 = scalar_lea.sflag [#allocation4], %s212
          %s214 = sand.u32 %s44, 1
          %s215 = smul.addr %s214, 16
          %s216 = scalar_lea.vmem [#allocation3], %s215
          %s218 = ssub.s32 256, 256
          %219 = vsyncadd %s213, %s218
          %s220 = smul.addr %s27, 6
          %s221 = sadd.s32 %s28, %s220
          %s222 = smul.addr %s221, 128
          %s223 = scalar_lea.hbm %s0, %s222
          %s224 = sshll.u32 %s216, 4
          %s225 = int_to_ptr.vmem [resolvable:$true] %s224
          %230 = dma.hbm_to_vmem [thread:$0]  %s223, 256, %s225, %s213, 384, 128, 8
        $region32: #{tpu_custom_call.1} parent=27 // pred_fallthru
          _
        // Predicated region
        $region33: #{tpu_custom_call.1} parent=27 // pred_check
          %p231 = pneg %p84
        $region34: #{tpu_custom_call.1} parent=27 // pred_check_branch
          %233 = sbr.rel (%p231) target = $region36
        $region35: #{tpu_custom_call.1} parent=27 // pred_region
          %s234 = sand.u32 %s74, 1
          %s235 = scalar_lea.sflag [#allocation7], %s234
          %s236 = sand.u32 %s74, 1
          %s237 = smul.addr %s236, 16
          %s238 = scalar_lea.vmem [#allocation6], %s237
          %s239 = sadd.s32 %s28, 1
          %s241 = ssub.s32 256, 256
          %242 = vsyncadd %s235, %s241
          %s243 = smul.addr %s27, 6
          %s244 = sadd.s32 %s239, %s243
          %s245 = smul.addr %s244, 128
          %s246 = scalar_lea.hbm %s1, %s245
          %s247 = sshll.u32 %s238, 4
          %s248 = int_to_ptr.vmem [resolvable:$true] %s247
          %253 = dma.hbm_to_vmem [thread:$0]  %s246, 256, %s248, %s235, 384, 128, 8
        $region36: #{tpu_custom_call.1} parent=27 // pred_fallthru
          _
      $region28: #{tpu_custom_call.1} parent=5 // pred_fallthru
        _
      %p254 = scmp.le.s32.totalorder 1, %s20
      %p255 = scmp.lt.s32.totalorder %s20, 5
      %p256 = pnand %p254, %p255
      %p257 = pneg %p256
      // Predicated region
      $region37: #{tpu_custom_call.1} parent=5 // pred_check
        _
      $region38: #{tpu_custom_call.1} parent=5 // pred_check_branch
        %259 = sbr.rel (%p256) target = $region40
      $region39: #{tpu_custom_call.1} parent=5 // pred_region
        %s260 = ssub.s32 %s20, 1
        %s261 = sand.u32 %s47, 1
        %s262 = scalar_lea.sflag [#allocation4], %s261
        %s263 = sand.u32 %s47, 1
        %s264 = smul.addr %s263, 16
        %s265 = scalar_lea.vmem [#allocation3], %s264
        // Predicated region
        $region41: #{tpu_custom_call.1} parent=39 // pred_check
          %p266 = pneg %p60
        $region42: #{tpu_custom_call.1} parent=39 // pred_check_branch
          %268 = sbr.rel (%p266) target = $region44
        $region43: #{tpu_custom_call.1} parent=39 // pred_region
          %269 = dma.done %s262, 256
        $region44: #{tpu_custom_call.1} parent=39 // pred_fallthru
          _
        %s270 = sand.u32 %s77, 1
        %s271 = scalar_lea.sflag [#allocation7], %s270
        %s272 = sand.u32 %s77, 1
        %s273 = smul.addr %s272, 16
        %s274 = scalar_lea.vmem [#allocation6], %s273
        // Predicated region
        $region45: #{tpu_custom_call.1} parent=39 // pred_check
          %p275 = pneg %p90
        $region46: #{tpu_custom_call.1} parent=39 // pred_check_branch
          %277 = sbr.rel (%p275) target = $region48
        $region47: #{tpu_custom_call.1} parent=39 // pred_region
          %278 = dma.done %s271, 256
        $region48: #{tpu_custom_call.1} parent=39 // pred_fallthru
          _
        %s279 = sand.u32 %s47, 1
        %s280 = scalar_lea.sflag [#allocation4], %s279
        %s281 = sand.u32 %s47, 1
        %s282 = smul.addr %s281, 16
        %s283 = scalar_lea.vmem [#allocation3], %s282
        %p284 = pneg %p60
        %p285 = pneg %p57
        %s286 = sand.u32 %s77, 1
        %s287 = scalar_lea.sflag [#allocation7], %s286
        %s288 = sand.u32 %s77, 1
        %s289 = smul.addr %s288, 16
        %s290 = scalar_lea.vmem [#allocation6], %s289
        %p291 = pneg %p90
        %p292 = pneg %p87
        %p293 = pneg %p111
        %p294 = pneg %p108
        %p295 = pneg %p132
        %p296 = pneg %p129
        %p297 = pneg %p153
        %p298 = pneg %p150
        %p299 = pneg %p181
        %p300 = pneg %p178
        %s301 = sand.u32 %s168, 1
        %s302 = scalar_lea.sflag [#allocation5], %s301
        %s303 = sand.u32 %s168, 1
        %s304 = smul.addr %s303, 32
        %s305 = scalar_lea.vmem [#allocation8], %s304
        %s306 = sadd.s32 %s30, 1
        %v307 = vld [vmem:[%s265] sm:$0xff]
        %v308 = vld [vmem:[%s265 + $0x8] sm:$0xff]
        %309 = vst [vmem:[#allocation2] sm:$0xff] %v307
        %310 = vst [vmem:[#allocation2 + $0x8] sm:$0xff] %v308
        %v311 = vld [vmem:[%s265] sm:$0xff]
        %v312 = vld [vmem:[%s265 + $0x8] sm:$0xff]
        %315 = vrot.lane.b32.xlu0 %v311, 127
        %v316 = vpop.permute.xlu0 %315
        %317 = vrot.lane.b32.xlu0 %v312, 127
        %v318 = vpop.permute.xlu0 %317
        %vm321 = vcmask 1039360
        %322 = vst.msk [vmem:[#allocation2 + $0x10] sm:$0xff] %vm321, %v316
        %323 = vst.msk [vmem:[#allocation2 + $0x18] sm:$0xff] %vm321, %v318
        %v324 = vld [vmem:[%s274] sm:$0xff]
        %v325 = vld [vmem:[%s274 + $0x8] sm:$0xff]
        %328 = vrot.lane.b32.xlu0 %v324, 127
        %v329 = vpop.permute.xlu0 %328
        %330 = vrot.lane.b32.xlu0 %v325, 127
        %v331 = vpop.permute.xlu0 %330
        %vm334 = vcmask 1048568
        %335 = vst.msk [vmem:[#allocation2 + $0x10] sm:$0xff] %vm334, %v329
        %336 = vst.msk [vmem:[#allocation2 + $0x18] sm:$0xff] %vm334, %v331
        %v337 = vld [vmem:[%s265] sm:$0xff]
        %v338 = vld [vmem:[%s265 + $0x8] sm:$0xff]
        %341 = vrot.lane.b32.xlu0 %v337, 126
        %v342 = vpop.permute.xlu0 %341
        %343 = vrot.lane.b32.xlu0 %v338, 126
        %v344 = vpop.permute.xlu0 %343
        %vm347 = vcmask 1031168
        %348 = vst.msk [vmem:[#allocation2 + $0x20] sm:$0xff] %vm347, %v342
        %349 = vst.msk [vmem:[#allocation2 + $0x28] sm:$0xff] %vm347, %v344
        %v350 = vld [vmem:[%s274] sm:$0xff]
        %v351 = vld [vmem:[%s274 + $0x8] sm:$0xff]
        %354 = vrot.lane.b32.xlu0 %v350, 126
        %v355 = vpop.permute.xlu0 %354
        %356 = vrot.lane.b32.xlu0 %v351, 126
        %v357 = vpop.permute.xlu0 %356
        %vm360 = vcmask 1048560
        %361 = vst.msk [vmem:[#allocation2 + $0x20] sm:$0xff] %vm360, %v355
        %362 = vst.msk [vmem:[#allocation2 + $0x28] sm:$0xff] %vm360, %v357
        %v363 = vld [vmem:[%s2] sm:$0xff]
        %v364 = vld [vmem:[%s2 + $0x8] sm:$0xff]
        %v365 = vld [vmem:[%s2 + $0x10] sm:$0xff]
        %v366 = vld [vmem:[%s2 + $0x18] sm:$0xff]
        %v367 = vld [vmem:[#allocation2] sm:$0xff]
        %v368 = vld [vmem:[#allocation2 + $0x8] sm:$0xff]
        %v369 = vld [vmem:[#allocation2 + $0x10] sm:$0xff]
        %v370 = vld [vmem:[#allocation2 + $0x18] sm:$0xff]
        %v371 = vld [vmem:[#allocation2 + $0x20] sm:$0xff]
        %v372 = vld [vmem:[#allocation2 + $0x28] sm:$0xff]
        %vm373 = vcmask 392192
        %v375 = vsel %vm373, %v363, 0
        %v378 = vsel %vm373, %v364, 0
        %v381 = vsel %vm373, %v365, 0
        %v384 = vsel %vm373, %v366, 0
        %386 = vmatprep.subr.mxu0 0.0
        %387 = vmatpush1.msra.mxu0 %v367
        %388 = vmatprep.subr.mxu0 0.0
        %389 = vmatpush1.msra.mxu0 %v368
        %390 = vmatprep.subr.mxu0 0.0
        %391 = vmatpush1.msra.mxu0 %v369
        %392 = vmatprep.subr.mxu0 0.0
        %393 = vmatpush1.msra.mxu0 %v370
        %394 = vmatprep.subr.mxu0 0.0
        %395 = vmatpush1.msra.mxu0 %v371
        %396 = vmatprep.subr.mxu0 0.0
        %397 = vmatpush1.msra.mxu0 %v372
        %398 = vmatprep.subr.mxu0 0.0
        %399 = vmatpush1.msra.mxu0 0.0
        %400 = vmatprep.subr.mxu0 0.0
        %401 = vmatpush1.msra.mxu0 0.0
        %402 = vmatprep.subr.mxu0 0.0
        %403 = vmatpush1.msra.mxu0 0.0
        %404 = vmatprep.subr.mxu0 0.0
        %405 = vmatpush1.msra.mxu0 0.0
        %406 = vmatprep.subr.mxu0 0.0
        %407 = vmatpush1.msra.mxu0 0.0
        %408 = vmatprep.subr.mxu0 0.0
        %409 = vmatpush1.msra.mxu0 0.0
        %410 = vmatprep.subr.mxu0 0.0
        %411 = vmatpush1.msra.mxu0 0.0
        %412 = vmatprep.subr.mxu0 0.0
        %413 = vmatpush1.msra.mxu0 0.0
        %414 = vmatprep.subr.mxu0 0.0
        %415 = vmatpush1.msra.mxu0 0.0
        %416 = vmatprep.subr.mxu0 0.0
        %417 = vmatpush1.msra.mxu0 0.0
        %418 = vmatprep.subr.mxu0 0.0
        %419 = vmatpush1.msra.mxu0 0.0
        %420 = vmatprep.subr.mxu0 0.0
        %421 = vmatpush1.msra.mxu0 0.0
        %422 = vmatprep.subr.mxu0 0.0
        %423 = vmatpush1.msra.mxu0 0.0
        %424 = vmatprep.subr.mxu0 0.0
        %425 = vmatpush1.msra.mxu0 0.0
        %426 = vmatprep.subr.mxu0 0.0
        %427 = vmatpush1.msra.mxu0 0.0
        %428 = vmatprep.subr.mxu0 0.0
        %429 = vmatpush1.msra.mxu0 0.0
        %430 = vmatprep.subr.mxu0 0.0
        %431 = vmatpush1.msra.mxu0 0.0
        %432 = vmatprep.subr.mxu0 0.0
        %433 = vmatpush1.msra.mxu0 0.0
        %434 = vmatprep.subr.mxu0 0.0
        %435 = vmatpush1.msra.mxu0 0.0
        %436 = vmatprep.subr.mxu0 0.0
        %437 = vmatpush1.msra.mxu0 0.0
        %438 = vmatprep.subr.mxu0 0.0
        %439 = vmatpush1.msra.mxu0 0.0
        %440 = vmatprep.subr.mxu0 0.0
        %441 = vmatpush1.msra.mxu0 0.0
        %442 = vmatprep.subr.mxu0 0.0
        %443 = vmatpush1.msra.mxu0 0.0
        %444 = vmatprep.subr.mxu0 0.0
        %445 = vmatpush1.msra.mxu0 0.0
        %446 = vmatprep.subr.mxu0 0.0
        %447 = vmatpush1.msra.mxu0 0.0
        %448 = vmatprep.subr.mxu0 0.0
        %449 = vmatpush1.msra.mxu0 0.0
        %450 = vmatprep.mubr.f32.mxu0 0.0
        %451 = vmatmul.mubr.f32.gmra.mrb[0].mxu0 %v375
        %v452 = vpop.f32.mrb[0].mxu0
        %v453 = vadd.f32 0.0, %v452
        %v454 = vpop.f32.mrb[0].mxu0
        %455 = vmatprep.mubr.f32.mxu0 0.0
        %456 = vmatmul.mubr.f32.gmra.mrb[0].mxu0 %v378
        %v457 = vpop.f32.mrb[0].mxu0
        %v458 = vadd.f32 0.0, %v457
        %v459 = vpop.f32.mrb[0].mxu0
        %460 = vmatprep.mubr.f32.mxu0 0.0
        %461 = vmatmul.mubr.f32.gmra.mrb[0].mxu0 %v381
        %v462 = vpop.f32.mrb[0].mxu0
        %v463 = vadd.f32 0.0, %v462
        %v464 = vpop.f32.mrb[0].mxu0
        %465 = vmatprep.mubr.f32.mxu0 0.0
        %466 = vmatmul.mubr.f32.gmra.mrb[0].mxu0 %v384
        %v467 = vpop.f32.mrb[0].mxu0
        %v468 = vadd.f32 0.0, %v467
        %v469 = vpop.f32.mrb[0].mxu0
        %470 = vdwg.mxu0
        %v471 = vld [vmem:[%s3] sm:$0xff]
        %v472 = vld [vmem:[%s3 + $0x8] sm:$0xff]
        %v473 = vld [vmem:[%s3 + $0x10] sm:$0xff]
        %v474 = vld [vmem:[%s3 + $0x18] sm:$0xff]
        %476 = vset.pattern.permute.xlu0 0
        %477 = vperm.xlu0 %476, %v471
        %v478 = vpop.permute.xlu0 %477
        %481 = vset.pattern.permute.xlu0 0
        %482 = vperm.xlu0 %481, %v472
        %v483 = vpop.permute.xlu0 %482
        %486 = vset.pattern.permute.xlu0 0
        %487 = vperm.xlu0 %486, %v473
        %v488 = vpop.permute.xlu0 %487
        %491 = vset.pattern.permute.xlu0 0
        %492 = vperm.xlu0 %491, %v474
        %v493 = vpop.permute.xlu0 %492
        %v495 = vmul.f32 %v453, %v478
        %v496 = vmul.f32 %v458, %v483
        %v497 = vmul.f32 %v463, %v488
        %v498 = vmul.f32 %v468, %v493
        %v499 = vld [vmem:[%s4] sm:$0xff]
        %v500 = vld [vmem:[%s4 + $0x8] sm:$0xff]
        %v501 = vld [vmem:[%s4 + $0x10] sm:$0xff]
        %v502 = vld [vmem:[%s4 + $0x18] sm:$0xff]
        %504 = vset.pattern.permute.xlu0 0
        %505 = vperm.xlu0 %504, %v499
        %v506 = vpop.permute.xlu0 %505
        %509 = vset.pattern.permute.xlu0 0
        %510 = vperm.xlu0 %509, %v500
        %v511 = vpop.permute.xlu0 %510
        %514 = vset.pattern.permute.xlu0 0
        %515 = vperm.xlu0 %514, %v501
        %v516 = vpop.permute.xlu0 %515
        %519 = vset.pattern.permute.xlu0 0
        %520 = vperm.xlu0 %519, %v502
        %v521 = vpop.permute.xlu0 %520
        %v523 = vadd.f32 %v495, %v506
        %v524 = vadd.f32 %v496, %v511
        %v525 = vadd.f32 %v497, %v516
        %v526 = vadd.f32 %v498, %v521
        %v527 = vxor.u32 %v523, 2147483648
        %v528 = vxor.u32 %v524, 2147483648
        %v529 = vxor.u32 %v525, 2147483648
        %v530 = vxor.u32 %v526, 2147483648
        %v531 = vmul.f32 %v527, 1.442695
        %v532 = vpow.pop %v531
        %v533 = vmul.f32 %v528, 1.442695
        %v534 = vpow.pop %v533
        %v535 = vmul.f32 %v529, 1.442695
        %v536 = vpow.pop %v535
        %v537 = vmul.f32 %v530, 1.442695
        %v538 = vpow.pop %v537
        %v539 = vadd.f32 %v532, 1.0
        %v540 = vadd.f32 %v534, 1.0
        %v541 = vadd.f32 %v536, 1.0
        %v542 = vadd.f32 %v538, 1.0
        %v543 = vrcp.pop %v539
        %v544 = vmul.f32 1.0, %v543
        %v545 = vrcp.pop %v540
        %v546 = vmul.f32 1.0, %v545
        %v547 = vrcp.pop %v541
        %v548 = vmul.f32 1.0, %v547
        %v549 = vrcp.pop %v542
        %v550 = vmul.f32 1.0, %v549
        %v551 = vmul.f32 %v523, %v544
        %v552 = vmul.f32 %v524, %v546
        %v553 = vmul.f32 %v525, %v548
        %v554 = vmul.f32 %v526, %v550
        %555 = vst [vmem:[%s305] sm:$0xff] %v551
        %556 = vst [vmem:[%s305 + $0x8] sm:$0xff] %v552
        %557 = vst [vmem:[%s305 + $0x10] sm:$0xff] %v553
        %558 = vst [vmem:[%s305 + $0x18] sm:$0xff] %v554
        %s559 = sand.u32 %s168, 1
        %s560 = scalar_lea.sflag [#allocation5], %s559
        %s561 = sand.u32 %s168, 1
        %s562 = smul.addr %s561, 32
        %s563 = scalar_lea.vmem [#allocation8], %s562
        // Predicated region
        $region49: #{tpu_custom_call.1} parent=39 // pred_check
          %p564 = pneg %p178
        $region50: #{tpu_custom_call.1} parent=39 // pred_check_branch
          %566 = sbr.rel (%p564) target = $region52
        $region51: #{tpu_custom_call.1} parent=39 // pred_region
          %s568 = ssub.s32 512, 512
          %569 = vsyncadd %s560, %s568
          %s570 = smul.addr %s29, 8
          %s571 = sadd.s32 %s30, %s570
          %s572 = smul.addr %s571, 128
          %s573 = scalar_lea.hbm %s5, %s572
          %s574 = sshll.u32 %s563, 4
          %s575 = int_to_ptr.vmem [resolvable:$true] %s574
          %580 = dma.vmem_to_hbm [thread:$0]  %s575, 512, %s573, %s560, 128, 256, 8
        $region52: #{tpu_custom_call.1} parent=39 // pred_fallthru
          _
      $region40: #{tpu_custom_call.1} parent=5 // pred_fallthru
        _
      %p581 = scmp.le.s32.totalorder 2, %s20
      // Predicated region
      $region53: #{tpu_custom_call.1} parent=5 // pred_check
        %p582 = pneg %p581
      $region54: #{tpu_custom_call.1} parent=5 // pred_check_branch
        %584 = sbr.rel (%p582) target = $region56
      $region55: #{tpu_custom_call.1} parent=5 // pred_region
        %s585 = ssub.s32 %s20, 2
        // Predicated region
        $region57: #{tpu_custom_call.1} parent=55 // pred_check
          %p586 = pneg %p184
        $region58: #{tpu_custom_call.1} parent=55 // pred_check_branch
          %588 = sbr.rel (%p586) target = $region60
        $region59: #{tpu_custom_call.1} parent=55 // pred_region
          %s589 = sand.u32 %s169, 1
          %s590 = scalar_lea.sflag [#allocation5], %s589
          %s591 = sand.u32 %s169, 1
          %s592 = smul.addr %s591, 32
          %s593 = scalar_lea.vmem [#allocation8], %s592
          %594 = dma.done %s590, 512
        $region60: #{tpu_custom_call.1} parent=55 // pred_fallthru
          _
      $region56: #{tpu_custom_call.1} parent=5 // pred_fallthru
        _
    $region6: #{tpu_custom_call.1} parent=1 // loop_footer
      %s24 = sadd.s32 1, %s20
    $region7: #{tpu_custom_call.1} parent=1 // loop_footer_branch
      %19 = sbr.rel target = $region3
    $region8: #{tpu_custom_call.1} parent=1 // loop_exit
      _
    %595 = vsyncpa [#allocation4], 1
    %s596 = scalar_lea.sflag [#allocation4], 1
    %597 = vsyncpa %s596, 1
    %598 = vsyncpa [#allocation7], 1
    %s599 = scalar_lea.sflag [#allocation7], 1
    %600 = vsyncpa %s599, 1
    %601 = vsyncpa [#allocation5], 1
    %s602 = scalar_lea.sflag [#allocation5], 1
    %603 = vsyncpa %s602, 1

</llo_original>
